<compile_context>
chip_gen: v7x
topology: tpu7x:2x2x1
jax: 0.10.0
libtpu: 0.0.40
codegen_flags: <defaults>
</compile_context>

<pallas_src>
import functools

import jax
import jax.numpy as jnp
from jax.experimental import pallas as pl
from jax.experimental.pallas import tpu as pltpu

HIDDEN = 128


def make_actor_kernel(num_action, num_sign, num_vola, num_out):
    """Fused forward for one batch tile [TB, S] -> [TB, num_out]."""

    def kernel(x_ref, w1_ref, b1_ref, w2_ref, b2_ref, wo_ref, bo_ref, o_ref):
        # hidden layer 1: [TB,S]bf16 @ [S,128]bf16 -> f32 acc, + bias, ReLU
        h = jnp.dot(x_ref[...].astype(jnp.bfloat16), w1_ref[...],
                    preferred_element_type=jnp.float32)
        h = jnp.maximum(h + b1_ref[...], 0.0)
        # hidden layer 2 (twolayered=True): [TB,128] @ [128,128]
        h = jnp.dot(h.astype(jnp.bfloat16), w2_ref[...],
                    preferred_element_type=jnp.float32)
        h = jnp.maximum(h + b2_ref[...], 0.0)
        # all heads fused into a single matmul: [TB,128] @ [128,num_out]
        y = jnp.dot(h.astype(jnp.bfloat16), wo_ref[...],
                    preferred_element_type=jnp.float32) + bo_ref[...]

        # Per-column activation masks hoisted to a single (1, num_out) vreg;
        # jnp.where broadcasts them over the [TB, num_out] tile.
        col = jax.lax.broadcasted_iota(jnp.int32, (1, num_out), 1)
        is_main = col < num_action

        # softmax restricted to the first num_action columns
        logits = jnp.where(is_main, y, -jnp.inf)
        m = jnp.max(logits, axis=-1, keepdims=True)
        e = jnp.where(is_main, jnp.exp(logits - m), 0.0)
        denom = jnp.sum(e, axis=-1, keepdims=True)
        out = e * pl.reciprocal(denom, approx=False)

        if num_sign > 0:  # 'sign' head(s): tanh(10 * x)
            is_sign = (col >= num_action) & (col < num_action + num_sign)
            out = jnp.where(is_sign, jnp.tanh(10.0 * y), out)
        if num_vola > 0:  # 'volas' heads: leaky_relu (PyTorch default slope 0.01)
            is_vola = col >= (num_action + num_sign)
            out = jnp.where(is_vola, jnp.where(y >= 0.0, y, 0.01 * y), out)

        o_ref[...] = out.astype(o_ref.dtype)

    return kernel


@functools.partial(jax.jit,
                   static_argnames=("num_action", "num_sign", "num_vola", "tb"))
def actor_forward(state, w1, b1, w2, b2, wo, bo, *,
                  num_action, num_sign, num_vola, tb=1024):
    """state: [B, num_state] f32 -> [B, num_action + num_sign + num_vola] f32.

    Weights w1/w2/wo are expected in bf16 (biases f32); matmuls run on the MXU
    in bf16 with f32 accumulation.
    """
    B, S = state.shape
    num_out = wo.shape[1]

    # Batch-tile selection:
    #  * cap at 4096 rows -> ~2 MiB of live f32 hidden state per tile, well
    #    inside the 32 MiB scoped VMEM default even on v7x (64 MiB physical);
    #  * multiple of 8 (sublane alignment);
    #  * whenever B > tb the grid automatically has >= 2 tiles, so the
    #    "parallel" batch axis can be sharded across v7x's two TensorCores.
    tb = min(tb, 4096, B)
    tb = max(8, (tb // 8) * 8)
    grid = (pl.cdiv(B, tb),)

    kernel = make_actor_kernel(num_action, num_sign, num_vola, num_out)
    return pl.pallas_call(
        kernel,
        out_shape=jax.ShapeDtypeStruct((B, num_out), jnp.float32),
        grid_spec=pltpu.PrefetchScalarGridSpec(
            num_scalar_prefetch=0,
            grid=grid,
            in_specs=[
                pl.BlockSpec((tb, S), lambda i: (i, 0)),    # batch-tiled input
                pl.BlockSpec(w1.shape, lambda i: (0, 0)),   # weights / biases
                pl.BlockSpec(b1.shape, lambda i: (0, 0)),   # stay resident in
                pl.BlockSpec(w2.shape, lambda i: (0, 0)),   # VMEM across grid
                pl.BlockSpec(b2.shape, lambda i: (0, 0)),   # steps (constant
                pl.BlockSpec(wo.shape, lambda i: (0, 0)),   # index_maps)
                pl.BlockSpec(bo.shape, lambda i: (0, 0)),
            ],
            out_specs=pl.BlockSpec((tb, num_out), lambda i: (i, 0)),
        ),
        compiler_params=pltpu.CompilerParams(
            # batch tiles are independent -> shard across v7x TensorCores
            dimension_semantics=("parallel",)),
    )(state, w1, b1, w2, b2, wo, bo)


def _uniform(key, shape, fan_in):
    bound = 1.0 / jnp.sqrt(fan_in)
    return jax.random.uniform(key, shape, jnp.float32, -bound, bound)


def init_params(key, num_state, num_action, dim, hidden=HIDDEN):
    """nn.Linear-style uniform init for all layers / heads (f32 masters)."""
    keys = jax.random.split(key, 12)
    w1 = _uniform(keys[0], (num_state, hidden), num_state)
    b1 = _uniform(keys[1], (1, hidden), num_state)
    w2 = _uniform(keys[2], (hidden, hidden), hidden)
    b2 = _uniform(keys[3], (1, hidden), hidden)
    w_main = _uniform(keys[4], (hidden, num_action), hidden)
    b_main = _uniform(keys[5], (1, num_action), hidden)
    w_sign = _uniform(keys[6], (hidden, 1), hidden)
    b_sign = _uniform(keys[7], (1, 1), hidden)
    w_vola = _uniform(keys[8], (hidden, dim), hidden)
    b_vola = _uniform(keys[9], (1, dim), hidden)
    return w1, b1, w2, b2, w_main, b_main, w_sign, b_sign, w_vola, b_vola


if __name__ == "__main__":
    key = jax.random.PRNGKey(0)
    k_params, k_state = jax.random.split(key)

    # Small, module-consistent demo shapes.
    batch = 8          # multiple of 8 (sublane alignment)
    num_state = 16
    num_action = 3
    dim = 2            # add_tasks = ['sign', 'volas'] -> num_add_tasks = 1 + dim
    num_sign, num_vola = 1, dim

    (w1, b1, w2, b2,
     w_main, b_main, w_sign, b_sign, w_vola, b_vola) = init_params(
        k_params, num_state, num_action, dim)

    # Fuse all heads into one weight/bias so the kernel runs a single matmul.
    wo = jnp.concatenate([w_main, w_sign, w_vola], axis=1)    # [128, num_out]
    bo = jnp.concatenate([b_main, b_sign, b_vola], axis=1)    # [1,   num_out]

    # Weights go to bf16 for native-MXU matmuls; biases stay f32.
    w1_bf, w2_bf, wo_bf = (w1.astype(jnp.bfloat16),
                           w2.astype(jnp.bfloat16),
                           wo.astype(jnp.bfloat16))

    state = jax.random.normal(k_state, (batch, num_state), jnp.float32)

    out = actor_forward(state, w1_bf, b1, w2_bf, b2, wo_bf, bo,
                        num_action=num_action, num_sign=num_sign,
                        num_vola=num_vola)
    out = jax.block_until_ready(out)

    # Pure-JAX f32 reference (same math as the PyTorch module, twolayered=True).
    h = jnp.maximum(state @ w1 + b1, 0.0)
    h = jnp.maximum(h @ w2 + b2, 0.0)
    probs = jax.nn.softmax(h @ w_main + b_main, axis=-1)
    y_sign = jnp.tanh(10.0 * (h @ w_sign + b_sign))
    y_vola_raw = h @ w_vola + b_vola
    y_vola = jnp.where(y_vola_raw >= 0.0, y_vola_raw, 0.01 * y_vola_raw)
    ref = jnp.concatenate([probs, y_sign, y_vola], axis=-1)

    # TODO(synk): loss_fn / loss_fn_A2C / create_add_task_targets are
    # training-side utilities, not part of forward, and are not ported.
    assert out.shape == (batch, num_action + num_sign + num_vola)
    # bf16-matmul path: compare against the f32 reference with bf16-appropriate
    # tolerances; also sanity-check the softmax head normalizes to 1.
    assert jnp.allclose(out, ref, atol=3e-2, rtol=3e-2), (
        f"max abs err {jnp.max(jnp.abs(out - ref))}")
    assert jnp.allclose(jnp.sum(out[:, :num_action], axis=-1), 1.0, atol=1e-3)

    print("KERNEL_OK")
</pallas_src>

<mosaic_0001>
module attributes {stable_mosaic.version = 11 : i64} {
  func.func @kernel(%arg0: i32, %arg1: memref<8x16xf32, #tpu.memory_space<vmem>>, %arg2: memref<16x128xbf16, #tpu.memory_space<vmem>>, %arg3: memref<1x128xf32, #tpu.memory_space<vmem>>, %arg4: memref<128x128xbf16, #tpu.memory_space<vmem>>, %arg5: memref<1x128xf32, #tpu.memory_space<vmem>>, %arg6: memref<128x6xbf16, #tpu.memory_space<vmem>>, %arg7: memref<1x6xf32, #tpu.memory_space<vmem>>, %arg8: memref<8x6xf32, #tpu.memory_space<vmem>>) attributes {dimension_semantics = [#tpu.dimension_semantics<parallel>], iteration_bounds = array<i64: 1>, scalar_prefetch = 0 : i64, scratch_operands = 0 : i64, tpu.core_type = #tpu.core_type<tc>, window_params = [{transform_indices = @transform_0, window_bounds = array<i64: 8, 16>}, {pipeline_mode = #tpu.pipeline_mode<synchronous>, transform_indices = @transform_1, window_bounds = array<i64: 16, 128>}, {pipeline_mode = #tpu.pipeline_mode<synchronous>, transform_indices = @transform_2, window_bounds = array<i64: 1, 128>}, {pipeline_mode = #tpu.pipeline_mode<synchronous>, transform_indices = @transform_3, window_bounds = array<i64: 128, 128>}, {pipeline_mode = #tpu.pipeline_mode<synchronous>, transform_indices = @transform_4, window_bounds = array<i64: 1, 128>}, {pipeline_mode = #tpu.pipeline_mode<synchronous>, transform_indices = @transform_5, window_bounds = array<i64: 128, 6>}, {pipeline_mode = #tpu.pipeline_mode<synchronous>, transform_indices = @transform_6, window_bounds = array<i64: 1, 6>}, {transform_indices = @transform_7, window_bounds = array<i64: 8, 6>}]} {
    %c0 = arith.constant 0 : index
    %c0_0 = arith.constant 0 : index
    %0 = vector.load %arg1[%c0, %c0_0] : memref<8x16xf32, #tpu.memory_space<vmem>>, vector<8x16xf32>
    %1 = arith.truncf %0 : vector<8x16xf32> to vector<8x16xbf16>
    %c0_1 = arith.constant 0 : index
    %c0_2 = arith.constant 0 : index
    %2 = vector.load %arg2[%c0_1, %c0_2] : memref<16x128xbf16, #tpu.memory_space<vmem>>, vector<16x128xbf16>
    %cst = arith.constant dense<0.000000e+00> : vector<8x128xf32>
    %3 = tpu.matmul %1, %2, %cst {dimension_numbers = #tpu.dot_dimension_numbers<[1], [0], [0], [1], [0, 0, 1, 1], [], []>} : vector<8x16xbf16>, vector<16x128xbf16>, vector<8x128xf32> -> vector<8x128xf32>
    %c0_3 = arith.constant 0 : index
    %c0_4 = arith.constant 0 : index
    %4 = vector.load %arg3[%c0_3, %c0_4] : memref<1x128xf32, #tpu.memory_space<vmem>>, vector<1x128xf32>
    %5 = vector.broadcast %4 : vector<1x128xf32> to vector<8x128xf32>
    %6 = arith.addf %3, %5 : vector<8x128xf32>
    %cst_5 = arith.constant 0.000000e+00 : f32
    %7 = vector.broadcast %cst_5 : f32 to vector<8x128xf32>
    %8 = arith.maximumf %6, %7 : vector<8x128xf32>
    %9 = arith.truncf %8 : vector<8x128xf32> to vector<8x128xbf16>
    %c0_6 = arith.constant 0 : index
    %c0_7 = arith.constant 0 : index
    %10 = vector.load %arg4[%c0_6, %c0_7] : memref<128x128xbf16, #tpu.memory_space<vmem>>, vector<128x128xbf16>
    %cst_8 = arith.constant dense<0.000000e+00> : vector<8x128xf32>
    %11 = tpu.matmul %9, %10, %cst_8 {dimension_numbers = #tpu.dot_dimension_numbers<[1], [0], [0], [1], [0, 0, 1, 1], [], []>} : vector<8x128xbf16>, vector<128x128xbf16>, vector<8x128xf32> -> vector<8x128xf32>
    %c0_9 = arith.constant 0 : index
    %c0_10 = arith.constant 0 : index
    %12 = vector.load %arg5[%c0_9, %c0_10] : memref<1x128xf32, #tpu.memory_space<vmem>>, vector<1x128xf32>
    %13 = vector.broadcast %12 : vector<1x128xf32> to vector<8x128xf32>
    %14 = arith.addf %11, %13 : vector<8x128xf32>
    %cst_11 = arith.constant 0.000000e+00 : f32
    %15 = vector.broadcast %cst_11 : f32 to vector<8x128xf32>
    %16 = arith.maximumf %14, %15 : vector<8x128xf32>
    %17 = arith.truncf %16 : vector<8x128xf32> to vector<8x128xbf16>
    %c0_12 = arith.constant 0 : index
    %c0_13 = arith.constant 0 : index
    %18 = vector.load %arg6[%c0_12, %c0_13] : memref<128x6xbf16, #tpu.memory_space<vmem>>, vector<128x6xbf16>
    %cst_14 = arith.constant dense<0.000000e+00> : vector<8x6xf32>
    %19 = tpu.matmul %17, %18, %cst_14 {dimension_numbers = #tpu.dot_dimension_numbers<[1], [0], [0], [1], [0, 0, 1, 1], [], []>} : vector<8x128xbf16>, vector<128x6xbf16>, vector<8x6xf32> -> vector<8x6xf32>
    %c0_15 = arith.constant 0 : index
    %c0_16 = arith.constant 0 : index
    %20 = vector.load %arg7[%c0_15, %c0_16] : memref<1x6xf32, #tpu.memory_space<vmem>>, vector<1x6xf32>
    %21 = vector.broadcast %20 : vector<1x6xf32> to vector<8x6xf32>
    %22 = arith.addf %19, %21 : vector<8x6xf32>
    %23 = tpu.iota {dimensions = array<i32: 1>} : vector<1x6xi32>
    %c3_i32 = arith.constant 3 : i32
    %24 = vector.broadcast %c3_i32 : i32 to vector<1x6xi32>
    %25 = arith.cmpi slt, %23, %24 : vector<1x6xi32>
    %cst_17 = arith.constant 0xFF800000 : f32
    %26 = vector.shape_cast %25 : vector<1x6xi1> to vector<1x6xi1>
    %27 = vector.broadcast %26 : vector<1x6xi1> to vector<8x6xi1>
    %28 = vector.broadcast %cst_17 : f32 to vector<8x6xf32>
    %29 = arith.select %27, %22, %28 : vector<8x6xi1>, vector<8x6xf32>
    %cst_18 = arith.constant dense<0xFF800000> : vector<8xf32>
    %30 = vector.multi_reduction <maximumf>, %29, %cst_18 [1] : vector<8x6xf32> to vector<8xf32>
    %31 = vector.shape_cast %30 : vector<8xf32> to vector<8x1xf32>
    %32 = vector.broadcast %31 : vector<8x1xf32> to vector<8x6xf32>
    %33 = arith.subf %29, %32 : vector<8x6xf32>
    %34 = math.exp %33 : vector<8x6xf32>
    %cst_19 = arith.constant 0.000000e+00 : f32
    %35 = vector.shape_cast %25 : vector<1x6xi1> to vector<1x6xi1>
    %36 = vector.broadcast %35 : vector<1x6xi1> to vector<8x6xi1>
    %37 = vector.broadcast %cst_19 : f32 to vector<8x6xf32>
    %38 = arith.select %36, %34, %37 : vector<8x6xi1>, vector<8x6xf32>
    %cst_20 = arith.constant dense<0.000000e+00> : vector<8xf32>
    %39 = vector.multi_reduction <add>, %38, %cst_20 [1] : vector<8x6xf32> to vector<8xf32>
    %40 = vector.shape_cast %39 : vector<8xf32> to vector<8x1xf32>
    %41 = tpu.reciprocal %40 : vector<8x1xf32> -> vector<8x1xf32>
    %42 = vector.broadcast %41 : vector<8x1xf32> to vector<8x6xf32>
    %43 = arith.mulf %38, %42 : vector<8x6xf32>
    %c3_i32_21 = arith.constant 3 : i32
    %44 = vector.broadcast %c3_i32_21 : i32 to vector<1x6xi32>
    %45 = arith.cmpi sge, %23, %44 : vector<1x6xi32>
    %c4_i32 = arith.constant 4 : i32
    %46 = vector.broadcast %c4_i32 : i32 to vector<1x6xi32>
    %47 = arith.cmpi slt, %23, %46 : vector<1x6xi32>
    %48 = arith.andi %45, %47 : vector<1x6xi1>
    %cst_22 = arith.constant 1.000000e+01 : f32
    %49 = vector.broadcast %cst_22 : f32 to vector<8x6xf32>
    %50 = arith.mulf %49, %22 : vector<8x6xf32>
    %51 = math.tanh %50 : vector<8x6xf32>
    %52 = vector.shape_cast %48 : vector<1x6xi1> to vector<1x6xi1>
    %53 = vector.broadcast %52 : vector<1x6xi1> to vector<8x6xi1>
    %54 = arith.select %53, %51, %43 : vector<8x6xi1>, vector<8x6xf32>
    %c4_i32_23 = arith.constant 4 : i32
    %55 = vector.broadcast %c4_i32_23 : i32 to vector<1x6xi32>
    %56 = arith.cmpi sge, %23, %55 : vector<1x6xi32>
    %cst_24 = arith.constant 0.000000e+00 : f32
    %57 = vector.broadcast %cst_24 : f32 to vector<8x6xf32>
    %58 = arith.cmpf oge, %22, %57 : vector<8x6xf32>
    %cst_25 = arith.constant 0.00999999977 : f32
    %59 = vector.broadcast %cst_25 : f32 to vector<8x6xf32>
    %60 = arith.mulf %59, %22 : vector<8x6xf32>
    %61 = arith.select %58, %22, %60 : vector<8x6xi1>, vector<8x6xf32>
    %62 = vector.shape_cast %56 : vector<1x6xi1> to vector<1x6xi1>
    %63 = vector.broadcast %62 : vector<1x6xi1> to vector<8x6xi1>
    %64 = arith.select %63, %61, %54 : vector<8x6xi1>, vector<8x6xf32>
    %c0_26 = arith.constant 0 : index
    %c0_27 = arith.constant 0 : index
    %65 = vector.load %arg8[%c0_26, %c0_27] : memref<8x6xf32, #tpu.memory_space<vmem>>, vector<8x6xf32>
    tpu.vector_store %arg8[%c0_26, %c0_27], %64 {strides = array<i32>} : memref<8x6xf32, #tpu.memory_space<vmem>>, vector<8x6xf32>,
    return
  }
  func.func @transform_0(%arg0: i32) -> (i32, i32) {
    %c0_i32 = arith.constant 0 : i32
    %c0_i32_0 = arith.constant 0 : i32
    return %arg0, %c0_i32 : i32, i32
  }
  func.func @transform_1(%arg0: i32) -> (i32, i32) {
    %c0_i32 = arith.constant 0 : i32
    %c0_i32_0 = arith.constant 0 : i32
    %c0_i32_1 = arith.constant 0 : i32
    return %c0_i32, %c0_i32_0 : i32, i32
  }
  func.func @transform_2(%arg0: i32) -> (i32, i32) {
    %c0_i32 = arith.constant 0 : i32
    %c0_i32_0 = arith.constant 0 : i32
    %c0_i32_1 = arith.constant 0 : i32
    return %c0_i32, %c0_i32_0 : i32, i32
  }
  func.func @transform_3(%arg0: i32) -> (i32, i32) {
    %c0_i32 = arith.constant 0 : i32
    %c0_i32_0 = arith.constant 0 : i32
    %c0_i32_1 = arith.constant 0 : i32
    return %c0_i32, %c0_i32_0 : i32, i32
  }
  func.func @transform_4(%arg0: i32) -> (i32, i32) {
    %c0_i32 = arith.constant 0 : i32
    %c0_i32_0 = arith.constant 0 : i32
    %c0_i32_1 = arith.constant 0 : i32
    return %c0_i32, %c0_i32_0 : i32, i32
  }
  func.func @transform_5(%arg0: i32) -> (i32, i32) {
    %c0_i32 = arith.constant 0 : i32
    %c0_i32_0 = arith.constant 0 : i32
    %c0_i32_1 = arith.constant 0 : i32
    return %c0_i32, %c0_i32_0 : i32, i32
  }
  func.func @transform_6(%arg0: i32) -> (i32, i32) {
    %c0_i32 = arith.constant 0 : i32
    %c0_i32_0 = arith.constant 0 : i32
    %c0_i32_1 = arith.constant 0 : i32
    return %c0_i32, %c0_i32_0 : i32, i32
  }
  func.func @transform_7(%arg0: i32) -> (i32, i32) {
    %c0_i32 = arith.constant 0 : i32
    %c0_i32_0 = arith.constant 0 : i32
    return %arg0, %c0_i32 : i32, i32
  }
}

</mosaic_0001>

<llo_original>
// kernel: actor_forward.1
$region0: #{actor_forward.1}
  #allocation0 [shape = 'u32[]', space=smem, size = 0x4, offset = 0x4, fixed_abs, tag = 'smem constant byte address 0x4 - core index']
  #allocation1 [shape = 'u32[144,128]{1,0:T(1,128)}', space=vmem, size = 0x12000, scoped, tag = 'internal scratch']
  %s0 = inlined_call_operand.vmem [shape: f32[8,16], index: 0, kind: input, shape index: {}]
  %s1 = inlined_call_operand.hbm [shape: bf16[16,128], index: 1, kind: input, shape index: {}]
  %s2 = inlined_call_operand.vmem [shape: f32[1,128], index: 2, kind: input, shape index: {}]
  %s3 = inlined_call_operand.vmem [shape: bf16[128,128], index: 3, kind: input, shape index: {}]
  %s4 = inlined_call_operand.vmem [shape: f32[1,128], index: 4, kind: input, shape index: {}]
  %s5 = inlined_call_operand.vmem [shape: bf16[128,6], index: 5, kind: input, shape index: {}]
  %s6 = inlined_call_operand.vmem [shape: f32[1,6], index: 6, kind: input, shape index: {}]
  %s7 = inlined_call_operand.hbm [shape: f32[8,6], index: 7, kind: output, shape index: {}]
  %s8 = sld [smem:[#allocation0]]
  $region42: #{actor_forward.1} parent=0
    _
  %s10 = ssub.s32 1, %s8
  %s11 = scalar_select 0, %s10, %s8
  $region1: #{actor_forward.1} parent=0
    #allocation2 [shape = 'u8[4096]{0}', space=vmem, size = 0x1000, scoped, tag = 'input window, operand 1, single buffered']
    #allocation3 [shape = 's32[1]{0}', space=sflag, size = 0x4, scoped, tag = 'scoped memory for actor_forward.1']
    #allocation4 [shape = 's32[1]{0}', space=sflag, size = 0x4, scoped, tag = 'scoped memory for actor_forward.1']
    #allocation5 [shape = 'u8[4096]{0}', space=vmem, size = 0x1000, scoped, tag = 'output window, operand 0, single buffered']
    %12 = vsyncpa [#allocation3], 0
    %13 = vsyncpa [#allocation4], 0
    // Predicated region
    $region2: #{actor_forward.1} parent=1 // pred_check
      _
    $region3: #{actor_forward.1} parent=1 // pred_check_branch
      %15 = sbr.rel (0) target = $region5
    $region4: #{actor_forward.1} parent=1 // pred_region
      _
    $region5: #{actor_forward.1} parent=1 // pred_fallthru
      _
    // Predicated region
    $region6: #{actor_forward.1} parent=1 // pred_check
      _
    $region7: #{actor_forward.1} parent=1 // pred_check_branch
      %17 = sbr.rel (0) target = $region9
    $region8: #{actor_forward.1} parent=1 // pred_region
      %s19 = ssub.s32 128, 128
      %20 = vsyncadd [#allocation3], %s19
      %s21 = sshll.u32 [#allocation2], 4
      %s22 = int_to_ptr.vmem [resolvable:$true] %s21
      %27 = dma.hbm_to_vmem [thread:$0]  %s1, 128, %s22, [#allocation3], 64, 64, 4
    $region9: #{actor_forward.1} parent=1 // pred_fallthru
      _
    // Predicated region
    $region10: #{actor_forward.1} parent=1 // pred_check
      _
    $region11: #{actor_forward.1} parent=1 // pred_check_branch
      %29 = sbr.rel (0) target = $region13
    $region12: #{actor_forward.1} parent=1 // pred_region
      _
    $region13: #{actor_forward.1} parent=1 // pred_fallthru
      _
    // Predicated region
    $region14: #{actor_forward.1} parent=1 // pred_check
      _
    $region15: #{actor_forward.1} parent=1 // pred_check_branch
      %31 = sbr.rel (0) target = $region17
    $region16: #{actor_forward.1} parent=1 // pred_region
      _
    $region17: #{actor_forward.1} parent=1 // pred_fallthru
      _
    // Predicated region
    $region18: #{actor_forward.1} parent=1 // pred_check
      _
    $region19: #{actor_forward.1} parent=1 // pred_check_branch
      %33 = sbr.rel (0) target = $region21
    $region20: #{actor_forward.1} parent=1 // pred_region
      _
    $region21: #{actor_forward.1} parent=1 // pred_fallthru
      _
    // Predicated region
    $region22: #{actor_forward.1} parent=1 // pred_check
      _
    $region23: #{actor_forward.1} parent=1 // pred_check_branch
      %35 = sbr.rel (0) target = $region25
    $region24: #{actor_forward.1} parent=1 // pred_region
      _
    $region25: #{actor_forward.1} parent=1 // pred_fallthru
      _
    // Predicated region
    $region26: #{actor_forward.1} parent=1 // pred_check
      _
    $region27: #{actor_forward.1} parent=1 // pred_check_branch
      %37 = sbr.rel (0) target = $region29
    $region28: #{actor_forward.1} parent=1 // pred_region
      _
    $region29: #{actor_forward.1} parent=1 // pred_fallthru
      _
    // Predicated region
    $region30: #{actor_forward.1} parent=1 // pred_check
      _
    $region31: #{actor_forward.1} parent=1 // pred_check_branch
      %39 = sbr.rel (0) target = $region33
    $region32: #{actor_forward.1} parent=1 // pred_region
      %40 = dma.done [#allocation3], 128
    $region33: #{actor_forward.1} parent=1 // pred_fallthru
      _
    %v42 = vld [vmem:[%s0] sm:$0xff]
    %v43 = vpack.c.bf16 %v42, %v42
    %v44 = vld [vmem:[#allocation2] sm:$0xf]
    %v45 = vld [vmem:[#allocation2 + $0x4] sm:$0xf]
    %v46 = vld [vmem:[%s2] sm:$0x1]
    %v48 = vlaneseq
    %v49 = vshrl.u32 %v48, 7
    %v50 = vsub.s32 0, %v49
    %v51 = vrot.slane %v46, %v50
    %v55 = vunpack.c.l.b16 %v44
    %v56 = vunpack.c.l.b16 %v45
    %v57 = vpack.c.b16 %v56, %v55
    %vm59 = vcmask 130048
    %v61 = vsel %vm59, %v43, 0
    %63 = vmatprep.subr.bf16.mxu0 0
    %64 = vmatpush1.bf16.msra.mxu0 %v57
    %65 = vmatprep.subr.bf16.mxu0 0
    %66 = vmatpush1.bf16.msra.mxu0 0
    %67 = vmatprep.subr.bf16.mxu0 0
    %68 = vmatpush1.bf16.msra.mxu0 0
    %69 = vmatprep.subr.bf16.mxu0 0
    %70 = vmatpush1.bf16.msra.mxu0 0
    %71 = vmatprep.subr.bf16.mxu0 0
    %72 = vmatpush1.bf16.msra.mxu0 0
    %73 = vmatprep.subr.bf16.mxu0 0
    %74 = vmatpush1.bf16.msra.mxu0 0
    %75 = vmatprep.subr.bf16.mxu0 0
    %76 = vmatpush1.bf16.msra.mxu0 0
    %77 = vmatprep.subr.bf16.mxu0 0
    %78 = vmatpush1.bf16.msra.mxu0 0
    %79 = vmatprep.subr.bf16.mxu0 0
    %80 = vmatpush1.bf16.msra.mxu0 0
    %81 = vmatprep.subr.bf16.mxu0 0
    %82 = vmatpush1.bf16.msra.mxu0 0
    %83 = vmatprep.subr.bf16.mxu0 0
    %84 = vmatpush1.bf16.msra.mxu0 0
    %85 = vmatprep.subr.bf16.mxu0 0
    %86 = vmatpush1.bf16.msra.mxu0 0
    %87 = vmatprep.subr.bf16.mxu0 0
    %88 = vmatpush1.bf16.msra.mxu0 0
    %89 = vmatprep.subr.bf16.mxu0 0
    %90 = vmatpush1.bf16.msra.mxu0 0
    %91 = vmatprep.subr.bf16.mxu0 0
    %92 = vmatpush1.bf16.msra.mxu0 0
    %93 = vmatprep.subr.bf16.mxu0 0
    %94 = vmatpush1.bf16.msra.mxu0 0
    %95 = vmatprep.mubr.bf16.mxu0 0
    %96 = vmatmul.mubr.bf16.gmra.mrb[0].mxu0 %v61
    %v97 = vpop.f32.mrb[0].mxu0
    %v98 = vadd.f32 %v51, %v97
    %v99 = vpop.f32.mrb[0].mxu0
    %v100 = vpop.f32.mrb[0].mxu0
    %v101 = vpop.f32.mrb[0].mxu0
    %102 = vdwg.mxu0
    %v103 = vmax.f32 %v98, 0.0
    %v104 = vpack.c.bf16 %v103, %v103
    %v105 = vld [vmem:[%s3] sm:$0xf]
    %v106 = vld [vmem:[%s3 + $0x4] sm:$0xf]
    %v107 = vld [vmem:[%s3 + $0x8] sm:$0xf]
    %v108 = vld [vmem:[%s3 + $0xc] sm:$0xf]
    %v109 = vld [vmem:[%s3 + $0x10] sm:$0xf]
    %v110 = vld [vmem:[%s3 + $0x14] sm:$0xf]
    %v111 = vld [vmem:[%s3 + $0x18] sm:$0xf]
    %v112 = vld [vmem:[%s3 + $0x1c] sm:$0xf]
    %v113 = vld [vmem:[%s3 + $0x20] sm:$0xf]
    %v114 = vld [vmem:[%s3 + $0x24] sm:$0xf]
    %v115 = vld [vmem:[%s3 + $0x28] sm:$0xf]
    %v116 = vld [vmem:[%s3 + $0x2c] sm:$0xf]
    %v117 = vld [vmem:[%s3 + $0x30] sm:$0xf]
    %v118 = vld [vmem:[%s3 + $0x34] sm:$0xf]
    %v119 = vld [vmem:[%s3 + $0x38] sm:$0xf]
    %v120 = vld [vmem:[%s3 + $0x3c] sm:$0xf]
    %v121 = vld [vmem:[%s4] sm:$0x1]
    %v123 = vlaneseq
    %v124 = vshrl.u32 %v123, 7
    %v125 = vsub.s32 0, %v124
    %v126 = vrot.slane %v121, %v125
    %v144 = vunpack.c.l.b16 %v105
    %v145 = vunpack.c.l.b16 %v106
    %v146 = vunpack.c.l.b16 %v107
    %v147 = vunpack.c.l.b16 %v108
    %v148 = vunpack.c.l.b16 %v109
    %v149 = vunpack.c.l.b16 %v110
    %v150 = vunpack.c.l.b16 %v111
    %v151 = vunpack.c.l.b16 %v112
    %v152 = vunpack.c.l.b16 %v113
    %v153 = vunpack.c.l.b16 %v114
    %v154 = vunpack.c.l.b16 %v115
    %v155 = vunpack.c.l.b16 %v116
    %v156 = vunpack.c.l.b16 %v117
    %v157 = vunpack.c.l.b16 %v118
    %v158 = vunpack.c.l.b16 %v119
    %v159 = vunpack.c.l.b16 %v120
    %v160 = vpack.c.b16 %v145, %v144
    %v161 = vpack.c.b16 %v147, %v146
    %v162 = vpack.c.b16 %v149, %v148
    %v163 = vpack.c.b16 %v151, %v150
    %v164 = vpack.c.b16 %v153, %v152
    %v165 = vpack.c.b16 %v155, %v154
    %v166 = vpack.c.b16 %v157, %v156
    %v167 = vpack.c.b16 %v159, %v158
    %176 = vmatprep.subr.bf16.mxu0 0
    %177 = vmatpush1.bf16.msra.mxu0 %v160
    %178 = vmatprep.subr.bf16.mxu0 0
    %179 = vmatpush1.bf16.msra.mxu0 %v161
    %180 = vmatprep.subr.bf16.mxu0 0
    %181 = vmatpush1.bf16.msra.mxu0 %v162
    %182 = vmatprep.subr.bf16.mxu0 0
    %183 = vmatpush1.bf16.msra.mxu0 %v163
    %184 = vmatprep.subr.bf16.mxu0 0
    %185 = vmatpush1.bf16.msra.mxu0 %v164
    %186 = vmatprep.subr.bf16.mxu0 0
    %187 = vmatpush1.bf16.msra.mxu0 %v165
    %188 = vmatprep.subr.bf16.mxu0 0
    %189 = vmatpush1.bf16.msra.mxu0 %v166
    %190 = vmatprep.subr.bf16.mxu0 0
    %191 = vmatpush1.bf16.msra.mxu0 %v167
    %192 = vmatprep.subr.bf16.mxu0 0
    %193 = vmatpush1.bf16.msra.mxu0 0
    %194 = vmatprep.subr.bf16.mxu0 0
    %195 = vmatpush1.bf16.msra.mxu0 0
    %196 = vmatprep.subr.bf16.mxu0 0
    %197 = vmatpush1.bf16.msra.mxu0 0
    %198 = vmatprep.subr.bf16.mxu0 0
    %199 = vmatpush1.bf16.msra.mxu0 0
    %200 = vmatprep.subr.bf16.mxu0 0
    %201 = vmatpush1.bf16.msra.mxu0 0
    %202 = vmatprep.subr.bf16.mxu0 0
    %203 = vmatpush1.bf16.msra.mxu0 0
    %204 = vmatprep.subr.bf16.mxu0 0
    %205 = vmatpush1.bf16.msra.mxu0 0
    %206 = vmatprep.subr.bf16.mxu0 0
    %207 = vmatpush1.bf16.msra.mxu0 0
    %208 = vmatprep.mubr.bf16.mxu0 0
    %209 = vmatmul.mubr.bf16.gmra.mrb[0].mxu0 %v104
    %v210 = vpop.f32.mrb[0].mxu0
    %v211 = vadd.f32 %v126, %v210
    %v212 = vpop.f32.mrb[0].mxu0
    %v213 = vpop.f32.mrb[0].mxu0
    %v214 = vpop.f32.mrb[0].mxu0
    %215 = vdwg.mxu0
    %v216 = vmax.f32 %v211, 0.0
    %v217 = vpack.c.bf16 %v216, %v216
    %v218 = vld [vmem:[%s5] sm:$0xf]
    %v219 = vld [vmem:[%s5 + $0x4] sm:$0xf]
    %v220 = vld [vmem:[%s5 + $0x8] sm:$0xf]
    %v221 = vld [vmem:[%s5 + $0xc] sm:$0xf]
    %v222 = vld [vmem:[%s5 + $0x10] sm:$0xf]
    %v223 = vld [vmem:[%s5 + $0x14] sm:$0xf]
    %v224 = vld [vmem:[%s5 + $0x18] sm:$0xf]
    %v225 = vld [vmem:[%s5 + $0x1c] sm:$0xf]
    %v226 = vld [vmem:[%s5 + $0x20] sm:$0xf]
    %v227 = vld [vmem:[%s5 + $0x24] sm:$0xf]
    %v228 = vld [vmem:[%s5 + $0x28] sm:$0xf]
    %v229 = vld [vmem:[%s5 + $0x2c] sm:$0xf]
    %v230 = vld [vmem:[%s5 + $0x30] sm:$0xf]
    %v231 = vld [vmem:[%s5 + $0x34] sm:$0xf]
    %v232 = vld [vmem:[%s5 + $0x38] sm:$0xf]
    %v233 = vld [vmem:[%s5 + $0x3c] sm:$0xf]
    %v234 = vld [vmem:[%s6] sm:$0x1]
    %v236 = vlaneseq
    %v237 = vshrl.u32 %v236, 7
    %v238 = vsub.s32 0, %v237
    %v239 = vrot.slane %v234, %v238
    %v257 = vunpack.c.l.b16 %v218
    %v258 = vunpack.c.l.b16 %v219
    %v259 = vunpack.c.l.b16 %v220
    %v260 = vunpack.c.l.b16 %v221
    %v261 = vunpack.c.l.b16 %v222
    %v262 = vunpack.c.l.b16 %v223
    %v263 = vunpack.c.l.b16 %v224
    %v264 = vunpack.c.l.b16 %v225
    %v265 = vunpack.c.l.b16 %v226
    %v266 = vunpack.c.l.b16 %v227
    %v267 = vunpack.c.l.b16 %v228
    %v268 = vunpack.c.l.b16 %v229
    %v269 = vunpack.c.l.b16 %v230
    %v270 = vunpack.c.l.b16 %v231
    %v271 = vunpack.c.l.b16 %v232
    %v272 = vunpack.c.l.b16 %v233
    %v273 = vpack.c.b16 %v258, %v257
    %v274 = vpack.c.b16 %v260, %v259
    %v275 = vpack.c.b16 %v262, %v261
    %v276 = vpack.c.b16 %v264, %v263
    %v277 = vpack.c.b16 %v266, %v265
    %v278 = vpack.c.b16 %v268, %v267
    %v279 = vpack.c.b16 %v270, %v269
    %v280 = vpack.c.b16 %v272, %v271
    %289 = vmatprep.subr.bf16.mxu0 0
    %290 = vmatpush1.bf16.msra.mxu0 %v273
    %291 = vmatprep.subr.bf16.mxu0 0
    %292 = vmatpush1.bf16.msra.mxu0 %v274
    %293 = vmatprep.subr.bf16.mxu0 0
    %294 = vmatpush1.bf16.msra.mxu0 %v275
    %295 = vmatprep.subr.bf16.mxu0 0
    %296 = vmatpush1.bf16.msra.mxu0 %v276
    %297 = vmatprep.subr.bf16.mxu0 0
    %298 = vmatpush1.bf16.msra.mxu0 %v277
    %299 = vmatprep.subr.bf16.mxu0 0
    %300 = vmatpush1.bf16.msra.mxu0 %v278
    %301 = vmatprep.subr.bf16.mxu0 0
    %302 = vmatpush1.bf16.msra.mxu0 %v279
    %303 = vmatprep.subr.bf16.mxu0 0
    %304 = vmatpush1.bf16.msra.mxu0 %v280
    %305 = vmatprep.subr.bf16.mxu0 0
    %306 = vmatpush1.bf16.msra.mxu0 0
    %307 = vmatprep.subr.bf16.mxu0 0
    %308 = vmatpush1.bf16.msra.mxu0 0
    %309 = vmatprep.subr.bf16.mxu0 0
    %310 = vmatpush1.bf16.msra.mxu0 0
    %311 = vmatprep.subr.bf16.mxu0 0
    %312 = vmatpush1.bf16.msra.mxu0 0
    %313 = vmatprep.subr.bf16.mxu0 0
    %314 = vmatpush1.bf16.msra.mxu0 0
    %315 = vmatprep.subr.bf16.mxu0 0
    %316 = vmatpush1.bf16.msra.mxu0 0
    %317 = vmatprep.subr.bf16.mxu0 0
    %318 = vmatpush1.bf16.msra.mxu0 0
    %319 = vmatprep.subr.bf16.mxu0 0
    %320 = vmatpush1.bf16.msra.mxu0 0
    %321 = vmatprep.mubr.bf16.mxu0 0
    %322 = vmatmul.mubr.bf16.gmra.mrb[0].mxu0 %v217
    %v323 = vpop.f32.mrb[0].mxu0
    %v324 = vadd.f32 %v239, %v323
    %v325 = vpop.f32.mrb[0].mxu0
    %v326 = vpop.f32.mrb[0].mxu0
    %v327 = vpop.f32.mrb[0].mxu0
    %328 = vdwg.mxu0
    %v329 = vlaneseq
    %v330 = vand.u32 %v329, 127
    %vm331 = vcmp.lt.s32.totalorder %v330, 3
    %v332 = vsel %vm331, 1, 0
    %vm333 = vcmp.eq.s32.totalorder %v332, 1
    %v334 = vsel %vm333, %v324, -inf
    %vm335 = vcmask 48128
    %v336 = vsel %vm335, %v334, -inf
    %337 = vmax.xlane.f32.xlu0 %v336
    %v338 = vpop.xlane.xlu0 %337
    %v339 = vsub.f32 %v334, %v338
    %v340 = vmul.f32 %v339, 1.442695
    %v341 = vpow.pop %v340
    %v342 = vsel %vm333, %v341, 0.0
    %v343 = vsel %vm335, %v342, 0.0
    %344 = vadd.xlane.f32.xlu0 %v343
    %v345 = vpop.xlane.xlu0 %344
    %v346 = vrcp.pop %v345
    %v347 = vmul.f32 %v342, %v346
    %vm348 = vcmp.ge.s32.totalorder %v330, 3
    %vm349 = vcmp.lt.s32.totalorder %v330, 4
    %vm350 = vmand %vm348, %vm349
    %v351 = vmul.f32 %v324, 10.0
    %v352 = vtanh.pop %v351
    %v353 = vsel %vm350, 1, 0
    %vm354 = vcmp.eq.s32.totalorder %v353, 1
    %v355 = vsel %vm354, %v352, %v347
    %vm356 = vcmp.ge.s32.totalorder %v330, 4
    %vm357 = vcmp.ge.f32.partialorder %v324, 0.0
    %v358 = vmul.f32 %v324, 0.01
    %v359 = vsel %vm357, %v324, %v358
    %v360 = vsel %vm356, 1, 0
    %vm361 = vcmp.eq.s32.totalorder %v360, 1
    %v362 = vsel %vm361, %v359, %v355
    %363 = vst.msk [vmem:[#allocation5] sm:$0xff] %vm335, %v362
    // Predicated region
    $region34: #{actor_forward.1} parent=1 // pred_check
      _
    $region35: #{actor_forward.1} parent=1 // pred_check_branch
      %365 = sbr.rel (0) target = $region37
    $region36: #{actor_forward.1} parent=1 // pred_region
      %s367 = ssub.s32 128, 128
      %368 = vsyncadd [#allocation4], %s367
      %s370 = sshll.u32 [#allocation5], 4
      %s371 = int_to_ptr.vmem [resolvable:$true] %s370
      %373 = dma.vmem_to_hbm [thread:$0]  %s371, 128, %s7, [#allocation4]
    $region37: #{actor_forward.1} parent=1 // pred_fallthru
      _
    // Predicated region
    $region38: #{actor_forward.1} parent=1 // pred_check
      _
    $region39: #{actor_forward.1} parent=1 // pred_check_branch
      %375 = sbr.rel (0) target = $region41
    $region40: #{actor_forward.1} parent=1 // pred_region
      %376 = dma.done [#allocation4], 128
    $region41: #{actor_forward.1} parent=1 // pred_fallthru
      _
    %377 = vsyncpa [#allocation3], 1
    %378 = vsyncpa [#allocation4], 1

</llo_original>
